<compile_context>
chip_gen: v5e
topology: v5e:2x2
jax: 0.10.0
libtpu: 0.0.40
codegen_flags: <defaults>
</compile_context>

<pallas_src>
import functools

import jax
import jax.numpy as jnp
import numpy as np
from jax.experimental import pallas as pl
from jax.experimental.pallas import tpu as pltpu

EPS = 1e-5                                   # nn.LayerNorm default eps
_INV_SQRT2 = float(1.0 / np.sqrt(2.0))

# Abramowitz & Stegun 7.1.26 rational approximation of erf (|err| <= 1.5e-7),
# built only from ops Mosaic lowers on every TPU generation (exp/mul/add/select).
_ERF_P = 0.3275911
_ERF_A = (0.254829592, -0.284496736, 1.421413741, -1.453152027, 1.061405429)


def _erf(z):
    az = jnp.abs(z)
    t = 1.0 / (1.0 + _ERF_P * az)
    poly = _ERF_A[4]
    for a in (_ERF_A[3], _ERF_A[2], _ERF_A[1], _ERF_A[0]):
        poly = poly * t + a
    y = 1.0 - poly * t * jnp.exp(-(az * az))
    return jnp.where(z < 0, -y, y)


def _gelu(h, approximate):
    if approximate:
        # tanh form -> EUP (its own VLIW slot); cheaper than erf on the VALU.
        c = float(np.sqrt(2.0 / np.pi))
        return 0.5 * h * (1.0 + jnp.tanh(c * (h + 0.044715 * h * h * h)))
    # PyTorch nn.GELU() default (exact erf form).
    return 0.5 * h * (1.0 + _erf(h * _INV_SQRT2))


def _layernorm(x, gamma, beta):
    # E[x^2] - mean^2: two independent lane reductions, no serial
    # mean -> subtract -> square -> mean chain.
    mean = jnp.mean(x, axis=-1, keepdims=True)
    var = jnp.maximum(jnp.mean(x * x, axis=-1, keepdims=True) - mean * mean, 0.0)
    return (x - mean) * jax.lax.rsqrt(var + EPS) * gamma + beta


def _gmlp_stack_kernel(x_ref,
                       g0_ref, be0_ref,      # ln0 gamma/beta     (1, 1, D) f32
                       w0_ref, b0_ref,       # linear0            (1, D, H) wd, (1, 1, H) f32
                       g1_ref, be1_ref,      # ln1 gamma/beta     (1, 1, C) f32
                       w1t_ref, b1_ref,      # linear1 (W1^T)     (1, L, L) wd, (1, 1, L) f32
                       w2_ref, b2_ref,       # linear2            (1, C, D) wd, (1, 1, D) f32
                       out_ref,              # (tb, L, D)
                       xs_ref,               # VMEM scratch (tb, L, D) f32 layer carry
                       *, fuse_linear0, approximate_gelu):
    layer = pl.program_id(1)

    @pl.when(layer == 0)
    def _():
        xs_ref[...] = x_ref[...].astype(jnp.float32)

    x = xs_ref[...]                                   # (tb, L, D) f32 residual input
    tb, L, D = x.shape
    C = g1_ref.shape[-1]
    cdt = w0_ref.dtype                                # matmul operand dtype (bf16)

    # ---- ln0 over seq_dim; merge (tb, L) into one MXU M dimension -------------
    xn = _layernorm(x, g0_ref[0], be0_ref[0])
    xn2 = xn.reshape(tb * L, D).astype(cdt)           # free relabel when L % 8 == 0

    # ---- linear0 (D -> H) as one / two large 2-D MXU dots ---------------------
    if fuse_linear0:
        h = jnp.dot(xn2, w0_ref[0], preferred_element_type=jnp.float32) + b0_ref[0]
        h = _gelu(h, approximate_gelu)
        u2, v2 = h[:, :C], h[:, C:]
    else:
        v2 = jnp.dot(xn2, w0_ref[0, :, C:],
                     preferred_element_type=jnp.float32) + b0_ref[0, :, C:]
        v2 = _gelu(v2, approximate_gelu)
        u2 = None                                     # deferred: smaller f32 live set

    # ---- ln1 over hidden_dim // 2 ---------------------------------------------
    vn2 = _layernorm(v2, g1_ref[0], be1_ref[0])       # (tb*L, C) f32

    # ---- spatial gating: ONE MXU dot over the L axis ---------------------------
    # vg[b, m, c] = sum_l W1[m, l] * vn[b, l, c] + b1[m]
    # Relayout vn so L sits in lanes: (tb, L, C) -> (tb, C, L) (per-batch XLU
    # transposes) -> (tb*C, L) (free relabel when C % 8 == 0), then a single
    # (tb*C, L) x (L, L) dot against the pre-transposed stationary weight.
    vn_t = jnp.swapaxes(vn2.reshape(tb, L, C), 1, 2)              # (tb, C, L) f32
    vn_t2 = vn_t.reshape(tb * C, L).astype(cdt)
    vg_t = jnp.dot(vn_t2, w1t_ref[0],
                   preferred_element_type=jnp.float32) + b1_ref[0]  # (tb*C, L) f32
    vg2 = jnp.swapaxes(vg_t.reshape(tb, C, L), 1, 2).reshape(tb * L, C)

    # ---- u-half + gate ----------------------------------------------------------
    if u2 is None:
        u2 = jnp.dot(xn2, w0_ref[0, :, :C],
                     preferred_element_type=jnp.float32) + b0_ref[0, :, :C]
        u2 = _gelu(u2, approximate_gelu)
    gated2 = (u2 * vg2).astype(cdt)

    # ---- linear2 (C -> D) + residual --------------------------------------------
    y2 = jnp.dot(gated2, w2_ref[0], preferred_element_type=jnp.float32) + b2_ref[0]
    y = y2.reshape(tb, L, D) + xs_ref[...]
    xs_ref[...] = y

    # Only the last layer's value is observable (output block index is constant
    # across the layer axis) -- skip the redundant earlier stores.
    @pl.when(layer == pl.num_programs(1) - 1)
    def _():
        out_ref[...] = y.astype(out_ref.dtype)


_PARAM_ORDER = ('g0', 'be0', 'w0', 'b0', 'g1', 'be1', 'w1t', 'b1', 'w2', 'b2')


def _vmem_capacity_bytes():
    try:
        return int(pltpu.get_tpu_info().vmem_capacity_bytes)   # 64 MiB v7x, 128 MiB v5e/v6e
    except Exception:
        return 64 << 20                                         # conservative fallback


def _vmem_bytes_estimate(tb, L, D, H, x_itemsize, w_itemsize, fuse0, act_in_bufs):
    C = H // 2
    carry = 4 * tb * L * D                                      # f32 carry scratch
    io = (act_in_bufs + 2) * tb * L * D * x_itemsize            # in/out activation blocks
    weights = 2 * w_itemsize * (D * H + L * L + C * D)          # double-buffered matmul weights
    small = 2 * 4 * (3 * D + 2 * C + H + L)                     # LN params / biases (f32)
    peak_n = H if fuse0 else C
    live = 4 * 4 * tb * L * max(D, peak_n) + 2 * 4 * tb * L * C  # live f32 intermediates (rough)
    return carry + io + weights + small + live


def gmlp_stack_pallas(x, params, *, batch_tile=None, weight_dtype=jnp.bfloat16,
                      fuse_linear0=None, approximate_gelu=False):
    """x: (B, L, D).  params: stacked per-layer parameters (see init_params).
    n_layers == 1 reproduces the PyTorch gMLP module's forward exactly.
    NOTE: for production shapes keep D, C, L multiples of 128 / 8 (lane-dense
    stores); bf16 inputs/outputs are accepted (carry stays f32)."""
    B, L, D = x.shape
    n_layers, Dw, H = params['w0'].shape
    assert Dw == D
    C = H // 2
    assert params['w1'].shape[-1] == L

    # Fuse linear0's u/v halves into one (tb*L, D) x (D, H) matmul when C is
    # below the MXU width (256 on v6e/v7x); keep them split otherwise (smaller
    # f32 live set -> larger batch tile on v7x's 64 MiB VMEM).
    fuse0 = (C < 256) if fuse_linear0 is None else bool(fuse_linear0)

    wd = weight_dtype
    wp = dict(
        g0=jnp.asarray(params['g0'], jnp.float32).reshape(n_layers, 1, D),
        be0=jnp.asarray(params['be0'], jnp.float32).reshape(n_layers, 1, D),
        w0=jnp.asarray(params['w0'], wd),
        b0=jnp.asarray(params['b0'], jnp.float32).reshape(n_layers, 1, H),
        g1=jnp.asarray(params['g1'], jnp.float32).reshape(n_layers, 1, C),
        be1=jnp.asarray(params['be1'], jnp.float32).reshape(n_layers, 1, C),
        w1t=jnp.swapaxes(jnp.asarray(params['w1'], wd), 1, 2),   # pre-transposed W1^T
        b1=jnp.asarray(params['b1'], jnp.float32).reshape(n_layers, 1, L),
        w2=jnp.asarray(params['w2'], wd),
        b2=jnp.asarray(params['b2'], jnp.float32).reshape(n_layers, 1, D),
    )

    x_itemsize = jnp.dtype(x.dtype).itemsize
    w_itemsize = jnp.dtype(wd).itemsize
    cap = _vmem_capacity_bytes()
    budget = int(cap * 0.75)
    act_in_bufs = 1 if n_layers > 1 else 2

    if batch_tile is None:
        batch_tile = 1
        for t in range(B, 0, -1):
            if B % t == 0 and _vmem_bytes_estimate(
                    t, L, D, H, x_itemsize, w_itemsize, fuse0, act_in_bufs) <= budget:
                batch_tile = t
                break
    assert B % batch_tile == 0, "batch_tile must divide the batch size"
    tb = batch_tile

    est = _vmem_bytes_estimate(tb, L, D, H, x_itemsize, w_itemsize, fuse0, act_in_bufs)
    vmem_limit = None
    if est > (32 << 20):                       # above the default scoped-VMEM limit
        # Clamp to real capacity (v7x has only 64 MiB of physical VMEM per TC).
        vmem_limit = int(min(est * 5 // 4, int(cap * 0.9)))

    act_map = lambda b, l: (b, 0, 0)
    if n_layers > 1:
        # x is only read at layer 0 and its block index is constant over the
        # layer axis, so depth-2 buffering would only prefetch the *next batch
        # tile* across an entire layer sweep: single-buffer it to save VMEM.
        act_in_spec = pl.BlockSpec((tb, L, D), act_map, pipeline_mode=pl.Buffered(1))
    else:
        act_in_spec = pl.BlockSpec((tb, L, D), act_map)
    out_spec = pl.BlockSpec((tb, L, D), act_map)

    def _pspec(shape):
        return pl.BlockSpec((1,) + tuple(shape[1:]), lambda b, l: (l, 0, 0))

    in_specs = [act_in_spec] + [_pspec(wp[k].shape) for k in _PARAM_ORDER]

    grid_spec = pltpu.PrefetchScalarGridSpec(
        num_scalar_prefetch=0,
        grid=(B // tb, n_layers),
        in_specs=in_specs,
        out_specs=out_spec,
        scratch_shapes=[pltpu.VMEM((tb, L, D), jnp.float32)],
    )

    kernel = functools.partial(_gmlp_stack_kernel,
                               fuse_linear0=fuse0,
                               approximate_gelu=approximate_gelu)

    fn = pl.pallas_call(
        kernel,
        out_shape=jax.ShapeDtypeStruct((B, L, D), x.dtype),
        grid_spec=grid_spec,
        compiler_params=pltpu.CompilerParams(
            dimension_semantics=("parallel", "arbitrary"),
            vmem_limit_bytes=vmem_limit),
    )
    return fn(x, *(wp[k] for k in _PARAM_ORDER))


# ----------------------------- reference (pure JAX) ----------------------------
def gmlp_stack_ref(x, params, *, weight_dtype=jnp.bfloat16, approximate_gelu=False):
    """Mirrors the kernel's numerics: bf16 matmul operands, f32 accumulation,
    f32 LayerNorm / GELU / residual (same math as the PyTorch module)."""
    n_layers, _, H = params['w0'].shape
    C = H // 2
    wd = weight_dtype
    for l in range(n_layers):
        xi = x
        xn = _layernorm(xi, params['g0'][l], params['be0'][l])
        h = jnp.dot(xn.astype(wd), params['w0'][l].astype(wd),
                    preferred_element_type=jnp.float32) + params['b0'][l]
        h = _gelu(h, approximate_gelu)
        u, v = h[..., :C], h[..., C:]
        vn = _layernorm(v, params['g1'][l], params['be1'][l])
        vg = jnp.einsum('ml,blc->bmc', params['w1'][l].astype(wd), vn.astype(wd),
                        preferred_element_type=jnp.float32) + params['b1'][l]
        y = jnp.dot((u * vg).astype(wd), params['w2'][l].astype(wd),
                    preferred_element_type=jnp.float32) + params['b2'][l]
        x = y + xi
    return x


# ----------------------------- parameter init ----------------------------------
def init_params(key, n_layers, L, D, H):
    C = H // 2
    ks = jax.random.split(key, 5)
    xavier_std = 0.01 * np.sqrt(2.0 / (L + L))    # xavier_normal_(gain=0.01) for linear1
    return dict(
        g0=jnp.ones((n_layers, 1, D), jnp.float32),
        be0=jnp.zeros((n_layers, 1, D), jnp.float32),
        w0=jax.random.normal(ks[0], (n_layers, D, H), jnp.float32) / np.sqrt(D),
        b0=jax.random.normal(ks[1], (n_layers, 1, H), jnp.float32) * 0.01,
        g1=jnp.ones((n_layers, 1, C), jnp.float32),
        be1=jnp.zeros((n_layers, 1, C), jnp.float32),
        w1=jax.random.normal(ks[2], (n_layers, L, L), jnp.float32) * xavier_std,
        b1=jnp.ones((n_layers, L, 1), jnp.float32),          # torch: ones_ on linear1 bias
        w2=jax.random.normal(ks[3], (n_layers, C, D), jnp.float32) / np.sqrt(C),
        b2=jax.random.normal(ks[4], (n_layers, 1, D), jnp.float32) * 0.01,
    )


if __name__ == "__main__":
    # Shapes implied by gMLP(query_len, seq_dim, hidden_dim): x is (B, query_len, seq_dim).
    B, query_len, seq_dim, hidden_dim = 2, 8, 16, 32

    key = jax.random.PRNGKey(0)
    kx, kp1, kp2 = jax.random.split(key, 3)
    x = jax.random.normal(kx, (B, query_len, seq_dim), jnp.float32)

    # 1) Single gMLP block == the PyTorch module's forward (fused linear0 path).
    params1 = init_params(kp1, 1, query_len, seq_dim, hidden_dim)
    out1 = jax.block_until_ready(gmlp_stack_pallas(x, params1))
    ref1 = gmlp_stack_ref(x, params1)
    np.testing.assert_allclose(np.asarray(out1), np.asarray(ref1), rtol=5e-3, atol=5e-3)

    # 2) 2-layer stack with batch_tile=1 and the split-linear0 path: exercises the
    #    layer-resident carry, last-layer-only store and the single-buffered input.
    params2 = init_params(kp2, 2, query_len, seq_dim, hidden_dim)
    out2 = jax.block_until_ready(
        gmlp_stack_pallas(x, params2, batch_tile=1, fuse_linear0=False))
    ref2 = gmlp_stack_ref(x, params2)
    np.testing.assert_allclose(np.asarray(out2), np.asarray(ref2), rtol=5e-3, atol=5e-3)

    print("KERNEL_OK")
</pallas_src>

<mosaic_0001>
module attributes {stable_mosaic.version = 11 : i64} {
  func.func @_gmlp_stack_kernel(%arg0: i32, %arg1: i32, %arg2: memref<2x8x16xf32, #tpu.memory_space<vmem>>, %arg3: memref<1x1x16xf32, #tpu.memory_space<vmem>>, %arg4: memref<1x1x16xf32, #tpu.memory_space<vmem>>, %arg5: memref<1x16x32xbf16, #tpu.memory_space<vmem>>, %arg6: memref<1x1x32xf32, #tpu.memory_space<vmem>>, %arg7: memref<1x1x16xf32, #tpu.memory_space<vmem>>, %arg8: memref<1x1x16xf32, #tpu.memory_space<vmem>>, %arg9: memref<1x8x8xbf16, #tpu.memory_space<vmem>>, %arg10: memref<1x1x8xf32, #tpu.memory_space<vmem>>, %arg11: memref<1x16x16xbf16, #tpu.memory_space<vmem>>, %arg12: memref<1x1x16xf32, #tpu.memory_space<vmem>>, %arg13: memref<2x8x16xf32, #tpu.memory_space<vmem>>, %arg14: memref<2x8x16xf32, #tpu.memory_space<vmem>>) attributes {dimension_semantics = [#tpu.dimension_semantics<parallel>, #tpu.dimension_semantics<arbitrary>], iteration_bounds = array<i64: 1, 1>, scalar_prefetch = 0 : i64, scratch_operands = 1 : i64, tpu.core_type = #tpu.core_type<tc>, window_params = [{transform_indices = @transform_0, window_bounds = array<i64: 2, 8, 16>}, {transform_indices = @transform_1, window_bounds = array<i64: 1, 1, 16>}, {transform_indices = @transform_2, window_bounds = array<i64: 1, 1, 16>}, {transform_indices = @transform_3, window_bounds = array<i64: 1, 16, 32>}, {transform_indices = @transform_4, window_bounds = array<i64: 1, 1, 32>}, {transform_indices = @transform_5, window_bounds = array<i64: 1, 1, 16>}, {transform_indices = @transform_6, window_bounds = array<i64: 1, 1, 16>}, {transform_indices = @transform_7, window_bounds = array<i64: 1, 8, 8>}, {transform_indices = @transform_8, window_bounds = array<i64: 1, 1, 8>}, {transform_indices = @transform_9, window_bounds = array<i64: 1, 16, 16>}, {transform_indices = @transform_10, window_bounds = array<i64: 1, 1, 16>}, {transform_indices = @transform_11, window_bounds = array<i64: 2, 8, 16>}]} {
    %c0_i32 = arith.constant 0 : i32
    %0 = arith.cmpi eq, %arg1, %c0_i32 : i32
    %1 = arith.extui %0 : i1 to i32
    %c0_i32_0 = arith.constant 0 : i32
    %2 = arith.cmpi ne, %1, %c0_i32_0 : i32
    scf.if %2 {
      %c0_70 = arith.constant 0 : index
      %c0_71 = arith.constant 0 : index
      %c0_72 = arith.constant 0 : index
      %143 = vector.load %arg2[%c0_70, %c0_71, %c0_72] : memref<2x8x16xf32, #tpu.memory_space<vmem>>, vector<2x8x16xf32>
      %c0_73 = arith.constant 0 : index
      %c0_74 = arith.constant 0 : index
      %c0_75 = arith.constant 0 : index
      %144 = vector.load %arg14[%c0_73, %c0_74, %c0_75] : memref<2x8x16xf32, #tpu.memory_space<vmem>>, vector<2x8x16xf32>
      tpu.vector_store %arg14[%c0_73, %c0_74, %c0_75], %143 {strides = array<i32>} : memref<2x8x16xf32, #tpu.memory_space<vmem>>, vector<2x8x16xf32>,
    } else {
    }
    %c0 = arith.constant 0 : index
    %c0_1 = arith.constant 0 : index
    %c0_2 = arith.constant 0 : index
    %3 = vector.load %arg14[%c0, %c0_1, %c0_2] : memref<2x8x16xf32, #tpu.memory_space<vmem>>, vector<2x8x16xf32>
    %c0_3 = arith.constant 0 : index
    %c0_4 = arith.constant 0 : index
    %c0_5 = arith.constant 0 : index
    %4 = vector.load %arg3[%c0_3, %c0_4, %c0_5] : memref<1x1x16xf32, #tpu.memory_space<vmem>>, vector<1x1x16xf32>
    %5 = vector.shape_cast %4 : vector<1x1x16xf32> to vector<1x16xf32>
    %c0_6 = arith.constant 0 : index
    %c0_7 = arith.constant 0 : index
    %c0_8 = arith.constant 0 : index
    %6 = vector.load %arg4[%c0_6, %c0_7, %c0_8] : memref<1x1x16xf32, #tpu.memory_space<vmem>>, vector<1x1x16xf32>
    %7 = vector.shape_cast %6 : vector<1x1x16xf32> to vector<1x16xf32>
    %cst = arith.constant dense<0.000000e+00> : vector<2x8xf32>
    %8 = vector.multi_reduction <add>, %3, %cst [2] : vector<2x8x16xf32> to vector<2x8xf32>
    %9 = vector.shape_cast %8 : vector<2x8xf32> to vector<2x8x1xf32>
    %cst_9 = arith.constant 1.600000e+01 : f32
    %10 = vector.broadcast %cst_9 : f32 to vector<2x8x1xf32>
    %11 = arith.divf %9, %10 : vector<2x8x1xf32>
    %12 = arith.mulf %3, %3 : vector<2x8x16xf32>
    %cst_10 = arith.constant dense<0.000000e+00> : vector<2x8xf32>
    %13 = vector.multi_reduction <add>, %12, %cst_10 [2] : vector<2x8x16xf32> to vector<2x8xf32>
    %14 = vector.shape_cast %13 : vector<2x8xf32> to vector<2x8x1xf32>
    %cst_11 = arith.constant 1.600000e+01 : f32
    %15 = vector.broadcast %cst_11 : f32 to vector<2x8x1xf32>
    %16 = arith.divf %14, %15 : vector<2x8x1xf32>
    %17 = arith.mulf %11, %11 : vector<2x8x1xf32>
    %18 = arith.subf %16, %17 : vector<2x8x1xf32>
    %cst_12 = arith.constant 0.000000e+00 : f32
    %19 = vector.broadcast %cst_12 : f32 to vector<2x8x1xf32>
    %20 = arith.maximumf %18, %19 : vector<2x8x1xf32>
    %21 = vector.broadcast %11 : vector<2x8x1xf32> to vector<2x8x16xf32>
    %22 = arith.subf %3, %21 : vector<2x8x16xf32>
    %cst_13 = arith.constant 9.99999974E-6 : f32
    %23 = vector.broadcast %cst_13 : f32 to vector<2x8x1xf32>
    %24 = arith.addf %20, %23 : vector<2x8x1xf32>
    %25 = math.rsqrt %24 : vector<2x8x1xf32>
    %26 = vector.broadcast %25 : vector<2x8x1xf32> to vector<2x8x16xf32>
    %27 = arith.mulf %22, %26 : vector<2x8x16xf32>
    %28 = vector.shape_cast %5 : vector<1x16xf32> to vector<1x1x16xf32>
    %29 = vector.broadcast %28 : vector<1x1x16xf32> to vector<2x8x16xf32>
    %30 = arith.mulf %27, %29 : vector<2x8x16xf32>
    %31 = vector.shape_cast %7 : vector<1x16xf32> to vector<1x1x16xf32>
    %32 = vector.broadcast %31 : vector<1x1x16xf32> to vector<2x8x16xf32>
    %33 = arith.addf %30, %32 : vector<2x8x16xf32>
    %34 = vector.shape_cast %33 : vector<2x8x16xf32> to vector<16x16xf32>
    %35 = arith.truncf %34 : vector<16x16xf32> to vector<16x16xbf16>
    %c0_14 = arith.constant 0 : index
    %c0_15 = arith.constant 0 : index
    %c0_16 = arith.constant 0 : index
    %36 = vector.load %arg5[%c0_14, %c0_15, %c0_16] : memref<1x16x32xbf16, #tpu.memory_space<vmem>>, vector<1x16x32xbf16>
    %37 = vector.shape_cast %36 : vector<1x16x32xbf16> to vector<16x32xbf16>
    %cst_17 = arith.constant dense<0.000000e+00> : vector<16x32xf32>
    %38 = tpu.matmul %35, %37, %cst_17 {dimension_numbers = #tpu.dot_dimension_numbers<[1], [0], [0], [1], [0, 0, 1, 1], [], []>} : vector<16x16xbf16>, vector<16x32xbf16>, vector<16x32xf32> -> vector<16x32xf32>
    %c0_18 = arith.constant 0 : index
    %c0_19 = arith.constant 0 : index
    %c0_20 = arith.constant 0 : index
    %39 = vector.load %arg6[%c0_18, %c0_19, %c0_20] : memref<1x1x32xf32, #tpu.memory_space<vmem>>, vector<1x1x32xf32>
    %40 = vector.shape_cast %39 : vector<1x1x32xf32> to vector<1x32xf32>
    %41 = vector.broadcast %40 : vector<1x32xf32> to vector<16x32xf32>
    %42 = arith.addf %38, %41 : vector<16x32xf32>
    %cst_21 = arith.constant 5.000000e-01 : f32
    %43 = vector.broadcast %cst_21 : f32 to vector<16x32xf32>
    %44 = arith.mulf %43, %42 : vector<16x32xf32>
    %cst_22 = arith.constant 0.707106769 : f32
    %45 = vector.broadcast %cst_22 : f32 to vector<16x32xf32>
    %46 = arith.mulf %42, %45 : vector<16x32xf32>
    %47 = math.absf %46 : vector<16x32xf32>
    %cst_23 = arith.constant 0.327591091 : f32
    %48 = vector.broadcast %cst_23 : f32 to vector<16x32xf32>
    %49 = arith.mulf %48, %47 : vector<16x32xf32>
    %cst_24 = arith.constant 1.000000e+00 : f32
    %50 = vector.broadcast %cst_24 : f32 to vector<16x32xf32>
    %51 = arith.addf %50, %49 : vector<16x32xf32>
    %cst_25 = arith.constant 1.000000e+00 : f32
    %52 = vector.broadcast %cst_25 : f32 to vector<16x32xf32>
    %53 = arith.divf %52, %51 : vector<16x32xf32>
    %cst_26 = arith.constant 1.06140542 : f32
    %54 = vector.broadcast %cst_26 : f32 to vector<16x32xf32>
    %55 = arith.mulf %54, %53 : vector<16x32xf32>
    %cst_27 = arith.constant -1.45315206 : f32
    %56 = vector.broadcast %cst_27 : f32 to vector<16x32xf32>
    %57 = arith.addf %55, %56 : vector<16x32xf32>
    %58 = arith.mulf %57, %53 : vector<16x32xf32>
    %cst_28 = arith.constant 1.42141378 : f32
    %59 = vector.broadcast %cst_28 : f32 to vector<16x32xf32>
    %60 = arith.addf %58, %59 : vector<16x32xf32>
    %61 = arith.mulf %60, %53 : vector<16x32xf32>
    %cst_29 = arith.constant -0.284496725 : f32
    %62 = vector.broadcast %cst_29 : f32 to vector<16x32xf32>
    %63 = arith.addf %61, %62 : vector<16x32xf32>
    %64 = arith.mulf %63, %53 : vector<16x32xf32>
    %cst_30 = arith.constant 0.254829586 : f32
    %65 = vector.broadcast %cst_30 : f32 to vector<16x32xf32>
    %66 = arith.addf %64, %65 : vector<16x32xf32>
    %67 = arith.mulf %66, %53 : vector<16x32xf32>
    %68 = arith.mulf %47, %47 : vector<16x32xf32>
    %cst_31 = arith.constant 0.000000e+00 : f32
    %69 = vector.broadcast %cst_31 : f32 to vector<16x32xf32>
    %70 = arith.subf %69, %68 : vector<16x32xf32>
    %71 = math.exp %70 : vector<16x32xf32>
    %72 = arith.mulf %67, %71 : vector<16x32xf32>
    %cst_32 = arith.constant 1.000000e+00 : f32
    %73 = vector.broadcast %cst_32 : f32 to vector<16x32xf32>
    %74 = arith.subf %73, %72 : vector<16x32xf32>
    %cst_33 = arith.constant 0.000000e+00 : f32
    %75 = vector.broadcast %cst_33 : f32 to vector<16x32xf32>
    %76 = arith.cmpf olt, %46, %75 : vector<16x32xf32>
    %cst_34 = arith.constant 0.000000e+00 : f32
    %77 = vector.broadcast %cst_34 : f32 to vector<16x32xf32>
    %78 = arith.subf %77, %74 : vector<16x32xf32>
    %79 = arith.select %76, %78, %74 : vector<16x32xi1>, vector<16x32xf32>
    %cst_35 = arith.constant 1.000000e+00 : f32
    %80 = vector.broadcast %cst_35 : f32 to vector<16x32xf32>
    %81 = arith.addf %80, %79 : vector<16x32xf32>
    %82 = arith.mulf %44, %81 : vector<16x32xf32>
    %83 = vector.extract_strided_slice %82 {offsets = [0, 0], sizes = [16, 16], strides = [1, 1]} : vector<16x32xf32> to vector<16x16xf32>
    %84 = vector.extract_strided_slice %82 {offsets = [0, 16], sizes = [16, 16], strides = [1, 1]} : vector<16x32xf32> to vector<16x16xf32>
    %c0_36 = arith.constant 0 : index
    %c0_37 = arith.constant 0 : index
    %c0_38 = arith.constant 0 : index
    %85 = vector.load %arg7[%c0_36, %c0_37, %c0_38] : memref<1x1x16xf32, #tpu.memory_space<vmem>>, vector<1x1x16xf32>
    %86 = vector.shape_cast %85 : vector<1x1x16xf32> to vector<1x16xf32>
    %c0_39 = arith.constant 0 : index
    %c0_40 = arith.constant 0 : index
    %c0_41 = arith.constant 0 : index
    %87 = vector.load %arg8[%c0_39, %c0_40, %c0_41] : memref<1x1x16xf32, #tpu.memory_space<vmem>>, vector<1x1x16xf32>
    %88 = vector.shape_cast %87 : vector<1x1x16xf32> to vector<1x16xf32>
    %cst_42 = arith.constant dense<0.000000e+00> : vector<16xf32>
    %89 = vector.multi_reduction <add>, %84, %cst_42 [1] : vector<16x16xf32> to vector<16xf32>
    %90 = vector.shape_cast %89 : vector<16xf32> to vector<16x1xf32>
    %cst_43 = arith.constant 1.600000e+01 : f32
    %91 = vector.broadcast %cst_43 : f32 to vector<16x1xf32>
    %92 = arith.divf %90, %91 : vector<16x1xf32>
    %93 = arith.mulf %84, %84 : vector<16x16xf32>
    %cst_44 = arith.constant dense<0.000000e+00> : vector<16xf32>
    %94 = vector.multi_reduction <add>, %93, %cst_44 [1] : vector<16x16xf32> to vector<16xf32>
    %95 = vector.shape_cast %94 : vector<16xf32> to vector<16x1xf32>
    %cst_45 = arith.constant 1.600000e+01 : f32
    %96 = vector.broadcast %cst_45 : f32 to vector<16x1xf32>
    %97 = arith.divf %95, %96 : vector<16x1xf32>
    %98 = arith.mulf %92, %92 : vector<16x1xf32>
    %99 = arith.subf %97, %98 : vector<16x1xf32>
    %cst_46 = arith.constant 0.000000e+00 : f32
    %100 = vector.broadcast %cst_46 : f32 to vector<16x1xf32>
    %101 = arith.maximumf %99, %100 : vector<16x1xf32>
    %102 = vector.broadcast %92 : vector<16x1xf32> to vector<16x16xf32>
    %103 = arith.subf %84, %102 : vector<16x16xf32>
    %cst_47 = arith.constant 9.99999974E-6 : f32
    %104 = vector.broadcast %cst_47 : f32 to vector<16x1xf32>
    %105 = arith.addf %101, %104 : vector<16x1xf32>
    %106 = math.rsqrt %105 : vector<16x1xf32>
    %107 = vector.broadcast %106 : vector<16x1xf32> to vector<16x16xf32>
    %108 = arith.mulf %103, %107 : vector<16x16xf32>
    %109 = vector.broadcast %86 : vector<1x16xf32> to vector<16x16xf32>
    %110 = arith.mulf %108, %109 : vector<16x16xf32>
    %111 = vector.broadcast %88 : vector<1x16xf32> to vector<16x16xf32>
    %112 = arith.addf %110, %111 : vector<16x16xf32>
    %113 = vector.shape_cast %112 : vector<16x16xf32> to vector<2x8x16xf32>
    %114 = tpu.transpose %113, [0, 2, 1] : vector<2x8x16xf32> -> vector<2x16x8xf32>
    %115 = vector.shape_cast %114 : vector<2x16x8xf32> to vector<32x8xf32>
    %116 = arith.truncf %115 : vector<32x8xf32> to vector<32x8xbf16>
    %c0_48 = arith.constant 0 : index
    %c0_49 = arith.constant 0 : index
    %c0_50 = arith.constant 0 : index
    %117 = vector.load %arg9[%c0_48, %c0_49, %c0_50] : memref<1x8x8xbf16, #tpu.memory_space<vmem>>, vector<1x8x8xbf16>
    %118 = vector.shape_cast %117 : vector<1x8x8xbf16> to vector<8x8xbf16>
    %cst_51 = arith.constant dense<0.000000e+00> : vector<32x8xf32>
    %119 = tpu.matmul %116, %118, %cst_51 {dimension_numbers = #tpu.dot_dimension_numbers<[1], [0], [0], [1], [0, 0, 1, 1], [], []>} : vector<32x8xbf16>, vector<8x8xbf16>, vector<32x8xf32> -> vector<32x8xf32>
    %c0_52 = arith.constant 0 : index
    %c0_53 = arith.constant 0 : index
    %c0_54 = arith.constant 0 : index
    %120 = vector.load %arg10[%c0_52, %c0_53, %c0_54] : memref<1x1x8xf32, #tpu.memory_space<vmem>>, vector<1x1x8xf32>
    %121 = vector.shape_cast %120 : vector<1x1x8xf32> to vector<1x8xf32>
    %122 = vector.broadcast %121 : vector<1x8xf32> to vector<32x8xf32>
    %123 = arith.addf %119, %122 : vector<32x8xf32>
    %124 = vector.shape_cast %123 : vector<32x8xf32> to vector<2x16x8xf32>
    %125 = tpu.transpose %124, [0, 2, 1] : vector<2x16x8xf32> -> vector<2x8x16xf32>
    %126 = vector.shape_cast %125 : vector<2x8x16xf32> to vector<16x16xf32>
    %127 = arith.mulf %83, %126 : vector<16x16xf32>
    %128 = arith.truncf %127 : vector<16x16xf32> to vector<16x16xbf16>
    %c0_55 = arith.constant 0 : index
    %c0_56 = arith.constant 0 : index
    %c0_57 = arith.constant 0 : index
    %129 = vector.load %arg11[%c0_55, %c0_56, %c0_57] : memref<1x16x16xbf16, #tpu.memory_space<vmem>>, vector<1x16x16xbf16>
    %130 = vector.shape_cast %129 : vector<1x16x16xbf16> to vector<16x16xbf16>
    %cst_58 = arith.constant dense<0.000000e+00> : vector<16x16xf32>
    %131 = tpu.matmul %128, %130, %cst_58 {dimension_numbers = #tpu.dot_dimension_numbers<[1], [0], [0], [1], [0, 0, 1, 1], [], []>} : vector<16x16xbf16>, vector<16x16xbf16>, vector<16x16xf32> -> vector<16x16xf32>
    %c0_59 = arith.constant 0 : index
    %c0_60 = arith.constant 0 : index
    %c0_61 = arith.constant 0 : index
    %132 = vector.load %arg12[%c0_59, %c0_60, %c0_61] : memref<1x1x16xf32, #tpu.memory_space<vmem>>, vector<1x1x16xf32>
    %133 = vector.shape_cast %132 : vector<1x1x16xf32> to vector<1x16xf32>
    %134 = vector.broadcast %133 : vector<1x16xf32> to vector<16x16xf32>
    %135 = arith.addf %131, %134 : vector<16x16xf32>
    %136 = vector.shape_cast %135 : vector<16x16xf32> to vector<2x8x16xf32>
    %c0_62 = arith.constant 0 : index
    %c0_63 = arith.constant 0 : index
    %c0_64 = arith.constant 0 : index
    %137 = vector.load %arg14[%c0_62, %c0_63, %c0_64] : memref<2x8x16xf32, #tpu.memory_space<vmem>>, vector<2x8x16xf32>
    %138 = arith.addf %136, %137 : vector<2x8x16xf32>
    %c0_65 = arith.constant 0 : index
    %c0_66 = arith.constant 0 : index
    %c0_67 = arith.constant 0 : index
    %139 = vector.load %arg14[%c0_65, %c0_66, %c0_67] : memref<2x8x16xf32, #tpu.memory_space<vmem>>, vector<2x8x16xf32>
    tpu.vector_store %arg14[%c0_65, %c0_66, %c0_67], %138 {strides = array<i32>} : memref<2x8x16xf32, #tpu.memory_space<vmem>>, vector<2x8x16xf32>,
    %c0_i32_68 = arith.constant 0 : i32
    %140 = arith.cmpi eq, %arg1, %c0_i32_68 : i32
    %141 = arith.extui %140 : i1 to i32
    %c0_i32_69 = arith.constant 0 : i32
    %142 = arith.cmpi ne, %141, %c0_i32_69 : i32
    scf.if %142 {
      %c0_70 = arith.constant 0 : index
      %c0_71 = arith.constant 0 : index
      %c0_72 = arith.constant 0 : index
      %143 = vector.load %arg13[%c0_70, %c0_71, %c0_72] : memref<2x8x16xf32, #tpu.memory_space<vmem>>, vector<2x8x16xf32>
      tpu.vector_store %arg13[%c0_70, %c0_71, %c0_72], %138 {strides = array<i32>} : memref<2x8x16xf32, #tpu.memory_space<vmem>>, vector<2x8x16xf32>,
    } else {
    }
    return
  }
  func.func @transform_0(%arg0: i32, %arg1: i32) -> (i32, i32, i32) {
    %c0_i32 = arith.constant 0 : i32
    %c0_i32_0 = arith.constant 0 : i32
    %c0_i32_1 = arith.constant 0 : i32
    return %arg0, %c0_i32, %c0_i32_0 : i32, i32, i32
  }
  func.func @transform_1(%arg0: i32, %arg1: i32) -> (i32, i32, i32) {
    %c0_i32 = arith.constant 0 : i32
    %c0_i32_0 = arith.constant 0 : i32
    %c0_i32_1 = arith.constant 0 : i32
    return %arg1, %c0_i32, %c0_i32_0 : i32, i32, i32
  }
  func.func @transform_2(%arg0: i32, %arg1: i32) -> (i32, i32, i32) {
    %c0_i32 = arith.constant 0 : i32
    %c0_i32_0 = arith.constant 0 : i32
    %c0_i32_1 = arith.constant 0 : i32
    return %arg1, %c0_i32, %c0_i32_0 : i32, i32, i32
  }
  func.func @transform_3(%arg0: i32, %arg1: i32) -> (i32, i32, i32) {
    %c0_i32 = arith.constant 0 : i32
    %c0_i32_0 = arith.constant 0 : i32
    %c0_i32_1 = arith.constant 0 : i32
    return %arg1, %c0_i32, %c0_i32_0 : i32, i32, i32
  }
  func.func @transform_4(%arg0: i32, %arg1: i32) -> (i32, i32, i32) {
    %c0_i32 = arith.constant 0 : i32
    %c0_i32_0 = arith.constant 0 : i32
    %c0_i32_1 = arith.constant 0 : i32
    return %arg1, %c0_i32, %c0_i32_0 : i32, i32, i32
  }
  func.func @transform_5(%arg0: i32, %arg1: i32) -> (i32, i32, i32) {
    %c0_i32 = arith.constant 0 : i32
    %c0_i32_0 = arith.constant 0 : i32
    %c0_i32_1 = arith.constant 0 : i32
    return %arg1, %c0_i32, %c0_i32_0 : i32, i32, i32
  }
  func.func @transform_6(%arg0: i32, %arg1: i32) -> (i32, i32, i32) {
    %c0_i32 = arith.constant 0 : i32
    %c0_i32_0 = arith.constant 0 : i32
    %c0_i32_1 = arith.constant 0 : i32
    return %arg1, %c0_i32, %c0_i32_0 : i32, i32, i32
  }
  func.func @transform_7(%arg0: i32, %arg1: i32) -> (i32, i32, i32) {
    %c0_i32 = arith.constant 0 : i32
    %c0_i32_0 = arith.constant 0 : i32
    %c0_i32_1 = arith.constant 0 : i32
    return %arg1, %c0_i32, %c0_i32_0 : i32, i32, i32
  }
  func.func @transform_8(%arg0: i32, %arg1: i32) -> (i32, i32, i32) {
    %c0_i32 = arith.constant 0 : i32
    %c0_i32_0 = arith.constant 0 : i32
    %c0_i32_1 = arith.constant 0 : i32
    return %arg1, %c0_i32, %c0_i32_0 : i32, i32, i32
  }
  func.func @transform_9(%arg0: i32, %arg1: i32) -> (i32, i32, i32) {
    %c0_i32 = arith.constant 0 : i32
    %c0_i32_0 = arith.constant 0 : i32
    %c0_i32_1 = arith.constant 0 : i32
    return %arg1, %c0_i32, %c0_i32_0 : i32, i32, i32
  }
  func.func @transform_10(%arg0: i32, %arg1: i32) -> (i32, i32, i32) {
    %c0_i32 = arith.constant 0 : i32
    %c0_i32_0 = arith.constant 0 : i32
    %c0_i32_1 = arith.constant 0 : i32
    return %arg1, %c0_i32, %c0_i32_0 : i32, i32, i32
  }
  func.func @transform_11(%arg0: i32, %arg1: i32) -> (i32, i32, i32) {
    %c0_i32 = arith.constant 0 : i32
    %c0_i32_0 = arith.constant 0 : i32
    %c0_i32_1 = arith.constant 0 : i32
    return %arg0, %c0_i32, %c0_i32_0 : i32, i32, i32
  }
}

</mosaic_0001>

<llo_original>
// kernel: tpu_custom_call.1
$region0: #{tpu_custom_call.1}
  #allocation0 [shape = 'u32[]', space=smem, size = 0x4, offset = 0x4, fixed_abs, tag = 'smem constant byte address 0x4 - core index']
  #allocation1 [shape = 'u32[72,128]{1,0:T(1,128)}', space=vmem, size = 0x9000, scoped, tag = 'internal scratch']
  #allocation2 [shape = 'f32[2,8,16]{2,1,0:T(8,128)}', space=vmem, size = 0x2000, scoped, tag = 'scratch operand']
  %s0 = inlined_call_operand.hbm [shape: f32[2,8,16], index: 0, kind: input, shape index: {}]
  %s1 = inlined_call_operand.hbm [shape: f32[1,1,16], index: 1, kind: input, shape index: {}]
  %s2 = inlined_call_operand.hbm [shape: f32[1,1,16], index: 2, kind: input, shape index: {}]
  %s3 = inlined_call_operand.hbm [shape: bf16[1,16,32], index: 3, kind: input, shape index: {}]
  %s4 = inlined_call_operand.hbm [shape: f32[1,1,32], index: 4, kind: input, shape index: {}]
  %s5 = inlined_call_operand.hbm [shape: f32[1,1,16], index: 5, kind: input, shape index: {}]
  %s6 = inlined_call_operand.hbm [shape: f32[1,1,16], index: 6, kind: input, shape index: {}]
  %s7 = inlined_call_operand.hbm [shape: bf16[1,8,8], index: 7, kind: input, shape index: {}]
  %s8 = inlined_call_operand.hbm [shape: f32[1,1,8], index: 8, kind: input, shape index: {}]
  %s9 = inlined_call_operand.vmem [shape: bf16[1,16,16], index: 9, kind: input, shape index: {}]
  %s10 = inlined_call_operand.vmem [shape: f32[1,1,16], index: 10, kind: input, shape index: {}]
  %s11 = inlined_call_operand.hbm [shape: f32[2,8,16], index: 11, kind: output, shape index: {}]
  %s12 = sld [smem:[#allocation0]]
  $region98: #{tpu_custom_call.1} parent=0
    _
  %s14 = ssub.s32 1, %s12
  %s15 = scalar_select 0, %s14, %s12
  $region1: #{tpu_custom_call.1} parent=0
    #allocation3 [shape = 'u8[8192]{0}', space=vmem, size = 0x2000, scoped, tag = 'input window, operand 0, single buffered']
    #allocation4 [shape = 's32[1]{0}', space=sflag, size = 0x4, scoped, tag = 'scoped memory for tpu_custom_call.1']
    #allocation5 [shape = 's32[1]{0}', space=sflag, size = 0x4, scoped, tag = 'scoped memory for tpu_custom_call.1']
    #allocation6 [shape = 'u8[512]{0}', space=vmem, size = 0x400, scoped, tag = 'input window, operand 1, single buffered']
    #allocation7 [shape = 's32[1]{0}', space=sflag, size = 0x4, scoped, tag = 'scoped memory for tpu_custom_call.1']
    #allocation8 [shape = 'u8[512]{0}', space=vmem, size = 0x400, scoped, tag = 'input window, operand 2, single buffered']
    #allocation9 [shape = 'u8[4096]{0}', space=vmem, size = 0x1000, scoped, tag = 'input window, operand 3, single buffered']
    #allocation10 [shape = 's32[1]{0}', space=sflag, size = 0x4, scoped, tag = 'scoped memory for tpu_custom_call.1']
    #allocation11 [shape = 'u8[512]{0}', space=vmem, size = 0x400, scoped, tag = 'input window, operand 4, single buffered']
    #allocation12 [shape = 'u8[512]{0}', space=vmem, size = 0x400, scoped, tag = 'input window, operand 5, single buffered']
    #allocation13 [shape = 's32[1]{0}', space=sflag, size = 0x4, scoped, tag = 'scoped memory for tpu_custom_call.1']
    #allocation14 [shape = 'u8[512]{0}', space=vmem, size = 0x400, scoped, tag = 'input window, operand 6, single buffered']
    #allocation15 [shape = 'u8[2048]{0}', space=vmem, size = 0x800, scoped, tag = 'input window, operand 7, single buffered']
    #allocation16 [shape = 's32[1]{0}', space=sflag, size = 0x4, scoped, tag = 'scoped memory for tpu_custom_call.1']
    #allocation17 [shape = 'u8[512]{0}', space=vmem, size = 0x400, scoped, tag = 'input window, operand 8, single buffered']
    #allocation18 [shape = 'u8[8192]{0}', space=vmem, size = 0x2000, scoped, tag = 'output window, operand 0, single buffered']
    %16 = vsyncpa [#allocation4], 0
    %17 = vsyncpa [#allocation7], 0
    %18 = vsyncpa [#allocation10], 0
    %19 = vsyncpa [#allocation13], 0
    %20 = vsyncpa [#allocation16], 0
    %21 = vsyncpa [#allocation5], 0
    // Predicated region
    $region2: #{tpu_custom_call.1} parent=1 // pred_check
      _
    $region3: #{tpu_custom_call.1} parent=1 // pred_check_branch
      %23 = sbr.rel (0) target = $region5
    $region4: #{tpu_custom_call.1} parent=1 // pred_region
      %25 = vsyncadd [#allocation4], 0
      %s26 = sshll.u32 %s0, 4
      %s27 = int_to_ptr.hbm [resolvable:$true] %s26
      %s28 = sshll.u32 [#allocation3], 4
      %s29 = int_to_ptr.vmem [resolvable:$true] %s28
      %34 = dma.hbm_to_vmem [thread:$0]  %s27, 256, %s29, [#allocation4], 128, 128, 8
    $region5: #{tpu_custom_call.1} parent=1 // pred_fallthru
      _
    // Predicated region
    $region6: #{tpu_custom_call.1} parent=1 // pred_check
      _
    $region7: #{tpu_custom_call.1} parent=1 // pred_check_branch
      %36 = sbr.rel (0) target = $region9
    $region8: #{tpu_custom_call.1} parent=1 // pred_region
      %38 = vsyncadd [#allocation7], 0
      %s40 = sshll.u32 %s1, 4
      %s41 = int_to_ptr.hbm [resolvable:$true] %s40
      %s42 = sshll.u32 [#allocation6], 4
      %s43 = int_to_ptr.vmem [resolvable:$true] %s42
      %45 = dma.hbm_to_vmem [thread:$0]  %s41, 16, %s43, [#allocation7]
    $region9: #{tpu_custom_call.1} parent=1 // pred_fallthru
      _
    // Predicated region
    $region10: #{tpu_custom_call.1} parent=1 // pred_check
      _
    $region11: #{tpu_custom_call.1} parent=1 // pred_check_branch
      %47 = sbr.rel (0) target = $region13
    $region12: #{tpu_custom_call.1} parent=1 // pred_region
      %49 = vsyncadd [#allocation7], 0
      %s51 = sshll.u32 %s2, 4
      %s52 = int_to_ptr.hbm [resolvable:$true] %s51
      %s53 = sshll.u32 [#allocation8], 4
      %s54 = int_to_ptr.vmem [resolvable:$true] %s53
      %56 = dma.hbm_to_vmem [thread:$0]  %s52, 16, %s54, [#allocation7]
    $region13: #{tpu_custom_call.1} parent=1 // pred_fallthru
      _
    // Predicated region
    $region14: #{tpu_custom_call.1} parent=1 // pred_check
      _
    $region15: #{tpu_custom_call.1} parent=1 // pred_check_branch
      %58 = sbr.rel (0) target = $region17
    $region16: #{tpu_custom_call.1} parent=1 // pred_region
      %60 = vsyncadd [#allocation10], 0
      %s61 = sshll.u32 %s3, 4
      %s62 = int_to_ptr.hbm [resolvable:$true] %s61
      %s63 = sshll.u32 [#allocation9], 4
      %s64 = int_to_ptr.vmem [resolvable:$true] %s63
      %69 = dma.hbm_to_vmem [thread:$0]  %s62, 128, %s64, [#allocation10], 64, 64, 4
    $region17: #{tpu_custom_call.1} parent=1 // pred_fallthru
      _
    // Predicated region
    $region18: #{tpu_custom_call.1} parent=1 // pred_check
      _
    $region19: #{tpu_custom_call.1} parent=1 // pred_check_branch
      %71 = sbr.rel (0) target = $region21
    $region20: #{tpu_custom_call.1} parent=1 // pred_region
      %73 = vsyncadd [#allocation10], 0
      %s75 = sshll.u32 %s4, 4
      %s76 = int_to_ptr.hbm [resolvable:$true] %s75
      %s77 = sshll.u32 [#allocation11], 4
      %s78 = int_to_ptr.vmem [resolvable:$true] %s77
      %80 = dma.hbm_to_vmem [thread:$0]  %s76, 16, %s78, [#allocation10]
    $region21: #{tpu_custom_call.1} parent=1 // pred_fallthru
      _
    // Predicated region
    $region22: #{tpu_custom_call.1} parent=1 // pred_check
      _
    $region23: #{tpu_custom_call.1} parent=1 // pred_check_branch
      %82 = sbr.rel (0) target = $region25
    $region24: #{tpu_custom_call.1} parent=1 // pred_region
      %84 = vsyncadd [#allocation13], 0
      %s86 = sshll.u32 %s5, 4
      %s87 = int_to_ptr.hbm [resolvable:$true] %s86
      %s88 = sshll.u32 [#allocation12], 4
      %s89 = int_to_ptr.vmem [resolvable:$true] %s88
      %91 = dma.hbm_to_vmem [thread:$0]  %s87, 16, %s89, [#allocation13]
    $region25: #{tpu_custom_call.1} parent=1 // pred_fallthru
      _
    // Predicated region
    $region26: #{tpu_custom_call.1} parent=1 // pred_check
      _
    $region27: #{tpu_custom_call.1} parent=1 // pred_check_branch
      %93 = sbr.rel (0) target = $region29
    $region28: #{tpu_custom_call.1} parent=1 // pred_region
      %95 = vsyncadd [#allocation13], 0
      %s97 = sshll.u32 %s6, 4
      %s98 = int_to_ptr.hbm [resolvable:$true] %s97
      %s99 = sshll.u32 [#allocation14], 4
      %s100 = int_to_ptr.vmem [resolvable:$true] %s99
      %102 = dma.hbm_to_vmem [thread:$0]  %s98, 16, %s100, [#allocation13]
    $region29: #{tpu_custom_call.1} parent=1 // pred_fallthru
      _
    // Predicated region
    $region30: #{tpu_custom_call.1} parent=1 // pred_check
      _
    $region31: #{tpu_custom_call.1} parent=1 // pred_check_branch
      %104 = sbr.rel (0) target = $region33
    $region32: #{tpu_custom_call.1} parent=1 // pred_region
      %106 = vsyncadd [#allocation16], 0
      %s108 = sshll.u32 %s7, 4
      %s109 = int_to_ptr.hbm [resolvable:$true] %s108
      %s110 = sshll.u32 [#allocation15], 4
      %s111 = int_to_ptr.vmem [resolvable:$true] %s110
      %113 = dma.hbm_to_vmem [thread:$0]  %s109, 64, %s111, [#allocation16]
    $region33: #{tpu_custom_call.1} parent=1 // pred_fallthru
      _
    // Predicated region
    $region34: #{tpu_custom_call.1} parent=1 // pred_check
      _
    $region35: #{tpu_custom_call.1} parent=1 // pred_check_branch
      %115 = sbr.rel (0) target = $region37
    $region36: #{tpu_custom_call.1} parent=1 // pred_region
      %117 = vsyncadd [#allocation16], 0
      %s119 = sshll.u32 %s8, 4
      %s120 = int_to_ptr.hbm [resolvable:$true] %s119
      %s121 = sshll.u32 [#allocation17], 4
      %s122 = int_to_ptr.vmem [resolvable:$true] %s121
      %124 = dma.hbm_to_vmem [thread:$0]  %s120, 16, %s122, [#allocation16]
    $region37: #{tpu_custom_call.1} parent=1 // pred_fallthru
      _
    // Predicated region
    $region38: #{tpu_custom_call.1} parent=1 // pred_check
      _
    $region39: #{tpu_custom_call.1} parent=1 // pred_check_branch
      %126 = sbr.rel (0) target = $region41
    $region40: #{tpu_custom_call.1} parent=1 // pred_region
      _
    $region41: #{tpu_custom_call.1} parent=1 // pred_fallthru
      _
    // Predicated region
    $region42: #{tpu_custom_call.1} parent=1 // pred_check
      _
    $region43: #{tpu_custom_call.1} parent=1 // pred_check_branch
      %128 = sbr.rel (0) target = $region45
    $region44: #{tpu_custom_call.1} parent=1 // pred_region
      _
    $region45: #{tpu_custom_call.1} parent=1 // pred_fallthru
      _
    // Predicated region
    $region46: #{tpu_custom_call.1} parent=1 // pred_check
      _
    $region47: #{tpu_custom_call.1} parent=1 // pred_check_branch
      %130 = sbr.rel (0) target = $region49
    $region48: #{tpu_custom_call.1} parent=1 // pred_region
      %132 = dma.done [#allocation4], 256
    $region49: #{tpu_custom_call.1} parent=1 // pred_fallthru
      _
    // Predicated region
    $region50: #{tpu_custom_call.1} parent=1 // pred_check
      _
    $region51: #{tpu_custom_call.1} parent=1 // pred_check_branch
      %134 = sbr.rel (0) target = $region53
    $region52: #{tpu_custom_call.1} parent=1 // pred_region
      %136 = dma.done [#allocation7], 16
    $region53: #{tpu_custom_call.1} parent=1 // pred_fallthru
      _
    // Predicated region
    $region54: #{tpu_custom_call.1} parent=1 // pred_check
      _
    $region55: #{tpu_custom_call.1} parent=1 // pred_check_branch
      %138 = sbr.rel (0) target = $region57
    $region56: #{tpu_custom_call.1} parent=1 // pred_region
      %140 = dma.done [#allocation7], 16
    $region57: #{tpu_custom_call.1} parent=1 // pred_fallthru
      _
    // Predicated region
    $region58: #{tpu_custom_call.1} parent=1 // pred_check
      _
    $region59: #{tpu_custom_call.1} parent=1 // pred_check_branch
      %142 = sbr.rel (0) target = $region61
    $region60: #{tpu_custom_call.1} parent=1 // pred_region
      %144 = dma.done [#allocation10], 128
    $region61: #{tpu_custom_call.1} parent=1 // pred_fallthru
      _
    // Predicated region
    $region62: #{tpu_custom_call.1} parent=1 // pred_check
      _
    $region63: #{tpu_custom_call.1} parent=1 // pred_check_branch
      %146 = sbr.rel (0) target = $region65
    $region64: #{tpu_custom_call.1} parent=1 // pred_region
      %148 = dma.done [#allocation10], 16
    $region65: #{tpu_custom_call.1} parent=1 // pred_fallthru
      _
    // Predicated region
    $region66: #{tpu_custom_call.1} parent=1 // pred_check
      _
    $region67: #{tpu_custom_call.1} parent=1 // pred_check_branch
      %150 = sbr.rel (0) target = $region69
    $region68: #{tpu_custom_call.1} parent=1 // pred_region
      %152 = dma.done [#allocation13], 16
    $region69: #{tpu_custom_call.1} parent=1 // pred_fallthru
      _
    // Predicated region
    $region70: #{tpu_custom_call.1} parent=1 // pred_check
      _
    $region71: #{tpu_custom_call.1} parent=1 // pred_check_branch
      %154 = sbr.rel (0) target = $region73
    $region72: #{tpu_custom_call.1} parent=1 // pred_region
      %156 = dma.done [#allocation13], 16
    $region73: #{tpu_custom_call.1} parent=1 // pred_fallthru
      _
    // Predicated region
    $region74: #{tpu_custom_call.1} parent=1 // pred_check
      _
    $region75: #{tpu_custom_call.1} parent=1 // pred_check_branch
      %158 = sbr.rel (0) target = $region77
    $region76: #{tpu_custom_call.1} parent=1 // pred_region
      %160 = dma.done [#allocation16], 64
    $region77: #{tpu_custom_call.1} parent=1 // pred_fallthru
      _
    // Predicated region
    $region78: #{tpu_custom_call.1} parent=1 // pred_check
      _
    $region79: #{tpu_custom_call.1} parent=1 // pred_check_branch
      %162 = sbr.rel (0) target = $region81
    $region80: #{tpu_custom_call.1} parent=1 // pred_region
      %164 = dma.done [#allocation16], 16
    $region81: #{tpu_custom_call.1} parent=1 // pred_fallthru
      _
    %p166 = scmp.eq.s32.totalorder 0, 0
    // Predicated region
    $region82: #{tpu_custom_call.1} parent=1 // pred_check
      %p167 = pneg %p166
    $region83: #{tpu_custom_call.1} parent=1 // pred_check_branch
      %169 = sbr.rel (%p167) target = $region85
    $region84: #{tpu_custom_call.1} parent=1 // pred_region
      %v170 = vld [vmem:[#allocation3] sm:$0xff]
      %v171 = vld [vmem:[#allocation3 + $0x8] sm:$0xff]
      %vm172 = vcmask 130048
      %173 = vst.msk [vmem:[#allocation2] sm:$0xff] %vm172, %v170
      %174 = vst.msk [vmem:[#allocation2 + $0x8] sm:$0xff] %vm172, %v171
    $region85: #{tpu_custom_call.1} parent=1 // pred_fallthru
      _
    %v175 = vld [vmem:[#allocation2] sm:$0xff]
    %v176 = vld [vmem:[#allocation2 + $0x8] sm:$0xff]
    %v177 = vld [vmem:[#allocation6] sm:$0x1]
    %v178 = vld [vmem:[#allocation8] sm:$0x1]
    %vm179 = vcmask 130048
    %v180 = vsel %vm179, %v175, 0.0
    %181 = vadd.xlane.f32.xlu0 %v180
    %v182 = vpop.xlane.xlu0 %181
    %v183 = vsel %vm179, %v176, 0.0
    %184 = vadd.xlane.f32.xlu0 %v183
    %v185 = vpop.xlane.xlu0 %184
    %v186 = vrcp.pop 16.0
    %v187 = vmul.f32 16.0, %v186
    %v188 = vsub.f32 1.0, %v187
    %v189 = vmul.f32 %v186, %v188
    %v190 = vadd.f32 %v186, %v189
    %vm191 = vweird.f32 %v186
    %v192 = vsel %vm191, %v186, %v190
    %v193 = vmul.f32 %v182, %v192
    %v194 = vmul.f32 %v185, %v192
    %v195 = vmul.f32 %v175, %v175
    %v196 = vmul.f32 %v176, %v176
    %v197 = vsel %vm179, %v195, 0.0
    %198 = vadd.xlane.f32.xlu0 %v197
    %v199 = vpop.xlane.xlu0 %198
    %v200 = vsel %vm179, %v196, 0.0
    %201 = vadd.xlane.f32.xlu0 %v200
    %v202 = vpop.xlane.xlu0 %201
    %v203 = vmul.f32 %v199, %v192
    %v204 = vmul.f32 %v202, %v192
    %v205 = vmul.f32 %v193, %v193
    %v206 = vmul.f32 %v194, %v194
    %v207 = vsub.f32 %v203, %v205
    %v208 = vsub.f32 %v204, %v206
    %v209 = vmax.f32 %v207, 0.0
    %v210 = vmax.f32 %v208, 0.0
    %v211 = vsub.f32 %v175, %v193
    %v212 = vsub.f32 %v176, %v194
    %v213 = vadd.f32 %v209, 1e-05
    %v214 = vadd.f32 %v210, 1e-05
    %v215 = vrsqrt.pop %v213
    %v216 = vmul.f32 %v215, %v213
    %v217 = vmul.f32 %v216, %v215
    %v218 = vmul.f32 0.5, %v217
    %v219 = vsub.f32 1.5, %v218
    %v220 = vmul.f32 %v215, %v219
    %vm221 = vweird.f32 %v213
    %vm222 = vweird.f32 %v215
    %vm223 = vmor %vm221, %vm222
    %v224 = vsel %vm223, %v215, %v220
    %v225 = vrsqrt.pop %v214
    %v226 = vmul.f32 %v225, %v214
    %v227 = vmul.f32 %v226, %v225
    %v228 = vmul.f32 0.5, %v227
    %v229 = vsub.f32 1.5, %v228
    %v230 = vmul.f32 %v225, %v229
    %vm231 = vweird.f32 %v214
    %vm232 = vweird.f32 %v225
    %vm233 = vmor %vm231, %vm232
    %v234 = vsel %vm233, %v225, %v230
    %v235 = vmul.f32 %v211, %v224
    %v236 = vmul.f32 %v212, %v234
    %v238 = vperm.slane %v177, 0
    %v240 = vmul.f32 %v235, %v238
    %v241 = vmul.f32 %v236, %v238
    %v243 = vperm.slane %v178, 0
    %v245 = vadd.f32 %v240, %v243
    %v246 = vadd.f32 %v241, %v243
    %v247 = vpack.c.bf16 %v246, %v245
    %v248 = vld [vmem:[#allocation9] sm:$0xf]
    %v249 = vld [vmem:[#allocation9 + $0x4] sm:$0xf]
    %v250 = vld [vmem:[#allocation11] sm:$0x1]
    %v252 = vperm.slane %v250, 0
    %v256 = vunpack.c.l.b16 %v248
    %v257 = vunpack.c.l.b16 %v249
    %v258 = vpack.c.b16 %v257, %v256
    %v261 = vsel %vm179, %v247, 0
    %263 = vmatpush.bf16.msra.mxu0 0
    %264 = vmatpush.bf16.msra.mxu0 0
    %265 = vmatpush.bf16.msra.mxu0 0
    %266 = vmatpush.bf16.msra.mxu0 0
    %267 = vmatpush.bf16.msra.mxu0 0
    %268 = vmatpush.bf16.msra.mxu0 0
    %269 = vmatpush.bf16.msra.mxu0 0
    %270 = vmatpush.bf16.msra.mxu0 %v258
    %271 = vmatmul.bf16.gmra.mxu0 %v261
    %v272 = vpop.f32.mrf.mxu0
    %v273 = vadd.f32 %v252, %v272
    %v274 = vpop.f32.mrf.mxu0
    %v275 = vadd.f32 %v252, %v274
    %276 = vdwg.mxu0
    %v277 = vmul.f32 %v273, 0.5
    %v278 = vmul.f32 %v275, 0.5
    %v279 = vmul.f32 %v273, 0.70710677
    %v280 = vmul.f32 %v275, 0.70710677
    %v281 = vand.u32 2147483647, %v279
    %v282 = vand.u32 2147483647, %v280
    %v283 = vmul.f32 %v281, 0.3275911
    %v284 = vmul.f32 %v282, 0.3275911
    %v285 = vadd.f32 %v283, 1.0
    %v286 = vadd.f32 %v284, 1.0
    %v287 = vrcp.pop %v285
    %v288 = vmul.f32 %v285, %v287
    %v289 = vsub.f32 1.0, %v288
    %v290 = vmul.f32 %v287, %v289
    %v291 = vadd.f32 %v287, %v290
    %vm292 = vweird.f32 %v285
    %vm293 = vweird.f32 %v287
    %vm294 = vmor %vm292, %vm293
    %v295 = vsel %vm294, %v287, %v291
    %v296 = vand.u32 2147483647, %v285
    %vm297 = vcmp.eq.f32.partialorder %v296, 8.507059e+37
    %v298 = vand.u32 %v285, 2147483648
    %v299 = vor.u32 1.1754944e-38, %v298
    %v300 = vsel %vm297, %v299, %v295
    %v301 = vmul.f32 1.0, %v300
    %v302 = vrcp.pop %v286
    %v303 = vmul.f32 %v286, %v302
    %v304 = vsub.f32 1.0, %v303
    %v305 = vmul.f32 %v302, %v304
    %v306 = vadd.f32 %v302, %v305
    %vm307 = vweird.f32 %v286
    %vm308 = vweird.f32 %v302
    %vm309 = vmor %vm307, %vm308
    %v310 = vsel %vm309, %v302, %v306
    %v311 = vand.u32 2147483647, %v286
    %vm312 = vcmp.eq.f32.partialorder %v311, 8.507059e+37
    %v313 = vand.u32 %v286, 2147483648
    %v314 = vor.u32 1.1754944e-38, %v313
    %v315 = vsel %vm312, %v314, %v310
    %v316 = vmul.f32 1.0, %v315
    %v317 = vmul.f32 %v301, 1.0614054
    %v318 = vmul.f32 %v316, 1.0614054
    %v319 = vadd.f32 %v317, -1.4531521
    %v320 = vadd.f32 %v318, -1.4531521
    %v321 = vmul.f32 %v319, %v301
    %v322 = vmul.f32 %v320, %v316
    %v323 = vadd.f32 %v321, 1.4214138
    %v324 = vadd.f32 %v322, 1.4214138
    %v325 = vmul.f32 %v323, %v301
    %v326 = vmul.f32 %v324, %v316
    %v327 = vadd.f32 %v325, -0.28449672
    %v328 = vadd.f32 %v326, -0.28449672
    %v329 = vmul.f32 %v327, %v301
    %v330 = vmul.f32 %v328, %v316
    %v331 = vadd.f32 %v329, 0.2548296
    %v332 = vadd.f32 %v330, 0.2548296
    %v333 = vmul.f32 %v331, %v301
    %v334 = vmul.f32 %v332, %v316
    %v335 = vmul.f32 %v281, %v281
    %v336 = vmul.f32 %v282, %v282
    %v337 = vsub.f32 0.0, %v335
    %v338 = vsub.f32 0.0, %v336
    %v339 = vmul.f32 %v337, 1.442695
    %v340 = vpow.pop %v339
    %v341 = vmul.f32 %v338, 1.442695
    %v342 = vpow.pop %v341
    %v343 = vmul.f32 %v333, %v340
    %v344 = vmul.f32 %v334, %v342
    %v345 = vsub.f32 1.0, %v343
    %v346 = vsub.f32 1.0, %v344
    %vm347 = vcmp.lt.f32.partialorder %v279, 0.0
    %vm348 = vcmp.lt.f32.partialorder %v280, 0.0
    %v349 = vsub.f32 0.0, %v345
    %v350 = vsub.f32 0.0, %v346
    %v351 = vsel %vm347, %v349, %v345
    %v352 = vsel %vm348, %v350, %v346
    %v353 = vadd.f32 %v351, 1.0
    %v354 = vadd.f32 %v352, 1.0
    %v355 = vmul.f32 %v277, %v353
    %v356 = vmul.f32 %v278, %v354
    %v357 = vld [vmem:[#allocation12] sm:$0x1]
    %v358 = vld [vmem:[#allocation14] sm:$0x1]
    %361 = vrot.lane.b32.xlu0 %v355, 112
    %v362 = vpop.permute.xlu0 %361
    %363 = vrot.lane.b32.xlu0 %v356, 112
    %v364 = vpop.permute.xlu0 %363
    %v367 = vsel %vm179, %v362, 0.0
    %368 = vadd.xlane.f32.xlu0 %v367
    %v369 = vpop.xlane.xlu0 %368
    %v370 = vsel %vm179, %v364, 0.0
    %371 = vadd.xlane.f32.xlu0 %v370
    %v372 = vpop.xlane.xlu0 %371
    %v373 = vmul.f32 %v369, %v192
    %v374 = vmul.f32 %v372, %v192
    %v375 = vmul.f32 %v355, %v355
    %v376 = vmul.f32 %v356, %v356
    %379 = vrot.lane.b32.xlu0 %v375, 112
    %v380 = vpop.permute.xlu0 %379
    %381 = vrot.lane.b32.xlu0 %v376, 112
    %v382 = vpop.permute.xlu0 %381
    %v385 = vsel %vm179, %v380, 0.0
    %386 = vadd.xlane.f32.xlu0 %v385
    %v387 = vpop.xlane.xlu0 %386
    %v388 = vsel %vm179, %v382, 0.0
    %389 = vadd.xlane.f32.xlu0 %v388
    %v390 = vpop.xlane.xlu0 %389
    %v391 = vmul.f32 %v387, %v192
    %v392 = vmul.f32 %v390, %v192
    %v393 = vmul.f32 %v373, %v373
    %v394 = vmul.f32 %v374, %v374
    %v395 = vsub.f32 %v391, %v393
    %v396 = vsub.f32 %v392, %v394
    %v397 = vmax.f32 %v395, 0.0
    %v398 = vmax.f32 %v396, 0.0
    %v399 = vsub.f32 %v355, %v373
    %v400 = vsub.f32 %v356, %v374
    %v401 = vadd.f32 %v397, 1e-05
    %v402 = vadd.f32 %v398, 1e-05
    %v403 = vrsqrt.pop %v401
    %v404 = vmul.f32 %v403, %v401
    %v405 = vmul.f32 %v404, %v403
    %v406 = vmul.f32 0.5, %v405
    %v407 = vsub.f32 1.5, %v406
    %v408 = vmul.f32 %v403, %v407
    %vm409 = vweird.f32 %v401
    %vm410 = vweird.f32 %v403
    %vm411 = vmor %vm409, %vm410
    %v412 = vsel %vm411, %v403, %v408
    %v413 = vrsqrt.pop %v402
    %v414 = vmul.f32 %v413, %v402
    %v415 = vmul.f32 %v414, %v413
    %v416 = vmul.f32 0.5, %v415
    %v417 = vsub.f32 1.5, %v416
    %v418 = vmul.f32 %v413, %v417
    %vm419 = vweird.f32 %v402
    %vm420 = vweird.f32 %v413
    %vm421 = vmor %vm419, %vm420
    %v422 = vsel %vm421, %v413, %v418
    %v423 = vmul.f32 %v399, %v412
    %v424 = vmul.f32 %v400, %v422
    %v426 = vperm.slane %v357, 0
    %427 = vrot.lane.b32.xlu0 %v426, 16
    %v428 = vpop.permute.xlu0 %427
    %v430 = vmul.f32 %v423, %v428
    %v431 = vmul.f32 %v424, %v428
    %v433 = vperm.slane %v358, 0
    %434 = vrot.lane.b32.xlu0 %v433, 16
    %v435 = vpop.permute.xlu0 %434
    %v437 = vadd.f32 %v430, %v435
    %v438 = vadd.f32 %v431, %v435
    %441 = vrot.lane.b32.xlu0 %v437, 112
    %v442 = vpop.permute.xlu0 %441
    %443 = vrot.lane.b32.xlu0 %v438, 112
    %v444 = vpop.permute.xlu0 %443
    %447 = vxpose.xlu0.b32.start [1/16] %v442, 128
    %448 = vxpose.xlu0.b32.cont [2/16] 0.0, 128
    %449 = vxpose.xlu0.b32.cont [3/16] 0.0, 128
    %450 = vxpose.xlu0.b32.cont [4/16] 0.0, 128
    %451 = vxpose.xlu0.b32.cont [5/16] 0.0, 128
    %452 = vxpose.xlu0.b32.cont [6/16] 0.0, 128
    %453 = vxpose.xlu0.b32.cont [7/16] 0.0, 128
    %454 = vxpose.xlu0.b32.cont [8/16] 0.0, 128
    %455 = vxpose.xlu0.b32.cont [9/16] 0.0, 128
    %456 = vxpose.xlu0.b32.cont [10/16] 0.0, 128
    %457 = vxpose.xlu0.b32.cont [11/16] 0.0, 128
    %458 = vxpose.xlu0.b32.cont [12/16] 0.0, 128
    %459 = vxpose.xlu0.b32.cont [13/16] 0.0, 128
    %460 = vxpose.xlu0.b32.cont [14/16] 0.0, 128
    %461 = vxpose.xlu0.b32.cont [15/16] 0.0, 128
    %462 = vxpose.xlu0.b32.end [16/16] 0.0, 128
    %v463 = vpop.trf.xlu0
    %v464 = vpop.trf.xlu0
    %v465 = vpop.trf.xlu0
    %v466 = vpop.trf.xlu0
    %v467 = vpop.trf.xlu0
    %v468 = vpop.trf.xlu0
    %v469 = vpop.trf.xlu0
    %v470 = vpop.trf.xlu0
    %v471 = vpop.trf.xlu0
    %v472 = vpop.trf.xlu0
    %v473 = vpop.trf.xlu0
    %v474 = vpop.trf.xlu0
    %v475 = vpop.trf.xlu0
    %v476 = vpop.trf.xlu0
    %v477 = vpop.trf.xlu0
    %v478 = vpop.trf.xlu0
    %479 = vxpose.xlu0.b32.start [1/16] %v444, 128
    %480 = vxpose.xlu0.b32.cont [2/16] 0.0, 128
    %481 = vxpose.xlu0.b32.cont [3/16] 0.0, 128
    %482 = vxpose.xlu0.b32.cont [4/16] 0.0, 128
    %483 = vxpose.xlu0.b32.cont [5/16] 0.0, 128
    %484 = vxpose.xlu0.b32.cont [6/16] 0.0, 128
    %485 = vxpose.xlu0.b32.cont [7/16] 0.0, 128
    %486 = vxpose.xlu0.b32.cont [8/16] 0.0, 128
    %487 = vxpose.xlu0.b32.cont [9/16] 0.0, 128
    %488 = vxpose.xlu0.b32.cont [10/16] 0.0, 128
    %489 = vxpose.xlu0.b32.cont [11/16] 0.0, 128
    %490 = vxpose.xlu0.b32.cont [12/16] 0.0, 128
    %491 = vxpose.xlu0.b32.cont [13/16] 0.0, 128
    %492 = vxpose.xlu0.b32.cont [14/16] 0.0, 128
    %493 = vxpose.xlu0.b32.cont [15/16] 0.0, 128
    %494 = vxpose.xlu0.b32.end [16/16] 0.0, 128
    %v495 = vpop.trf.xlu0
    %v496 = vpop.trf.xlu0
    %v497 = vpop.trf.xlu0
    %v498 = vpop.trf.xlu0
    %v499 = vpop.trf.xlu0
    %v500 = vpop.trf.xlu0
    %v501 = vpop.trf.xlu0
    %v502 = vpop.trf.xlu0
    %v503 = vpop.trf.xlu0
    %v504 = vpop.trf.xlu0
    %v505 = vpop.trf.xlu0
    %v506 = vpop.trf.xlu0
    %v507 = vpop.trf.xlu0
    %v508 = vpop.trf.xlu0
    %v509 = vpop.trf.xlu0
    %v510 = vpop.trf.xlu0
    %v511 = vpack.c.bf16 %v464, %v463
    %v512 = vpack.c.bf16 %v496, %v495
    %v513 = vld [vmem:[#allocation15] sm:$0xf]
    %v514 = vld [vmem:[#allocation17] sm:$0x1]
    %v516 = vperm.slane %v514, 0
    %vm518 = vcmask 64512
    %v520 = vsel %vm518, %v511, 0
    %v523 = vsel %vm518, %v512, 0
    %vm525 = vcmask 1043456
    %v527 = vsel %vm525, %v513, 0
    %529 = vmatpush.bf16.msra.mxu0 0
    %530 = vmatpush.bf16.msra.mxu0 0
    %531 = vmatpush.bf16.msra.mxu0 0
    %532 = vmatpush.bf16.msra.mxu0 0
    %533 = vmatpush.bf16.msra.mxu0 0
    %534 = vmatpush.bf16.msra.mxu0 0
    %535 = vmatpush.bf16.msra.mxu0 0
    %536 = vmatpush.bf16.msra.mxu0 %v527
    %537 = vmatmul.bf16.gmra.mxu0 %v520
    %v538 = vpop.f32.mrf.mxu0
    %v539 = vadd.f32 %v516, %v538
    %v540 = vpop.f32.mrf.mxu0
    %v541 = vadd.f32 %v516, %v540
    %542 = vmatmul.bf16.gmra.mxu0 %v523
    %v543 = vpop.f32.mrf.mxu0
    %v544 = vadd.f32 %v516, %v543
    %v545 = vpop.f32.mrf.mxu0
    %v546 = vadd.f32 %v516, %v545
    %547 = vdwg.mxu0
    %548 = vxpose.xlu0.b32.start [1/16] %v539, 128
    %549 = vxpose.xlu0.b32.cont [2/16] %v541, 128
    %550 = vxpose.xlu0.b32.cont [3/16] 0.0, 128
    %551 = vxpose.xlu0.b32.cont [4/16] 0.0, 128
    %552 = vxpose.xlu0.b32.cont [5/16] 0.0, 128
    %553 = vxpose.xlu0.b32.cont [6/16] 0.0, 128
    %554 = vxpose.xlu0.b32.cont [7/16] 0.0, 128
    %555 = vxpose.xlu0.b32.cont [8/16] 0.0, 128
    %556 = vxpose.xlu0.b32.cont [9/16] 0.0, 128
    %557 = vxpose.xlu0.b32.cont [10/16] 0.0, 128
    %558 = vxpose.xlu0.b32.cont [11/16] 0.0, 128
    %559 = vxpose.xlu0.b32.cont [12/16] 0.0, 128
    %560 = vxpose.xlu0.b32.cont [13/16] 0.0, 128
    %561 = vxpose.xlu0.b32.cont [14/16] 0.0, 128
    %562 = vxpose.xlu0.b32.cont [15/16] 0.0, 128
    %563 = vxpose.xlu0.b32.end [16/16] 0.0, 128
    %v564 = vpop.trf.xlu0
    %v565 = vpop.trf.xlu0
    %v566 = vpop.trf.xlu0
    %v567 = vpop.trf.xlu0
    %v568 = vpop.trf.xlu0
    %v569 = vpop.trf.xlu0
    %v570 = vpop.trf.xlu0
    %v571 = vpop.trf.xlu0
    %v572 = vpop.trf.xlu0
    %v573 = vpop.trf.xlu0
    %v574 = vpop.trf.xlu0
    %v575 = vpop.trf.xlu0
    %v576 = vpop.trf.xlu0
    %v577 = vpop.trf.xlu0
    %v578 = vpop.trf.xlu0
    %v579 = vpop.trf.xlu0
    %580 = vxpose.xlu0.b32.start [1/16] %v544, 128
    %581 = vxpose.xlu0.b32.cont [2/16] %v546, 128
    %582 = vxpose.xlu0.b32.cont [3/16] 0.0, 128
    %583 = vxpose.xlu0.b32.cont [4/16] 0.0, 128
    %584 = vxpose.xlu0.b32.cont [5/16] 0.0, 128
    %585 = vxpose.xlu0.b32.cont [6/16] 0.0, 128
    %586 = vxpose.xlu0.b32.cont [7/16] 0.0, 128
    %587 = vxpose.xlu0.b32.cont [8/16] 0.0, 128
    %588 = vxpose.xlu0.b32.cont [9/16] 0.0, 128
    %589 = vxpose.xlu0.b32.cont [10/16] 0.0, 128
    %590 = vxpose.xlu0.b32.cont [11/16] 0.0, 128
    %591 = vxpose.xlu0.b32.cont [12/16] 0.0, 128
    %592 = vxpose.xlu0.b32.cont [13/16] 0.0, 128
    %593 = vxpose.xlu0.b32.cont [14/16] 0.0, 128
    %594 = vxpose.xlu0.b32.cont [15/16] 0.0, 128
    %595 = vxpose.xlu0.b32.end [16/16] 0.0, 128
    %v596 = vpop.trf.xlu0
    %v597 = vpop.trf.xlu0
    %v598 = vpop.trf.xlu0
    %v599 = vpop.trf.xlu0
    %v600 = vpop.trf.xlu0
    %v601 = vpop.trf.xlu0
    %v602 = vpop.trf.xlu0
    %v603 = vpop.trf.xlu0
    %v604 = vpop.trf.xlu0
    %v605 = vpop.trf.xlu0
    %v606 = vpop.trf.xlu0
    %v607 = vpop.trf.xlu0
    %v608 = vpop.trf.xlu0
    %v609 = vpop.trf.xlu0
    %v610 = vpop.trf.xlu0
    %v611 = vpop.trf.xlu0
    %v612 = vmul.f32 %v355, %v564
    %v613 = vmul.f32 %v356, %v596
    %v614 = vpack.c.bf16 %v613, %v612
    %v615 = vld [vmem:[%s9] sm:$0xf]
    %v616 = vld [vmem:[%s9 + $0x4] sm:$0xf]
    %v617 = vld [vmem:[%s10] sm:$0x1]
    %v619 = vperm.slane %v617, 0
    %v623 = vunpack.c.l.b16 %v615
    %v624 = vunpack.c.l.b16 %v616
    %v625 = vpack.c.b16 %v624, %v623
    %v628 = vsel %vm179, %v614, 0
    %630 = vmatpush.bf16.msra.mxu0 0
    %631 = vmatpush.bf16.msra.mxu0 0
    %632 = vmatpush.bf16.msra.mxu0 0
    %633 = vmatpush.bf16.msra.mxu0 0
    %634 = vmatpush.bf16.msra.mxu0 0
    %635 = vmatpush.bf16.msra.mxu0 0
    %636 = vmatpush.bf16.msra.mxu0 0
    %637 = vmatpush.bf16.msra.mxu0 %v625
    %638 = vmatmul.bf16.gmra.mxu0 %v628
    %v639 = vpop.f32.mrf.mxu0
    %v640 = vadd.f32 %v619, %v639
    %v641 = vpop.f32.mrf.mxu0
    %v642 = vadd.f32 %v619, %v641
    %643 = vdwg.mxu0
    %v644 = vadd.f32 %v640, %v175
    %v645 = vadd.f32 %v642, %v176
    %646 = vst.msk [vmem:[#allocation2] sm:$0xff] %vm179, %v644
    %647 = vst.msk [vmem:[#allocation2 + $0x8] sm:$0xff] %vm179, %v645
    // Predicated region
    $region86: #{tpu_custom_call.1} parent=1 // pred_check
      %p648 = pneg %p166
    $region87: #{tpu_custom_call.1} parent=1 // pred_check_branch
      %650 = sbr.rel (%p648) target = $region89
    $region88: #{tpu_custom_call.1} parent=1 // pred_region
      %651 = vst.msk [vmem:[#allocation18] sm:$0xff] %vm179, %v644
      %652 = vst.msk [vmem:[#allocation18 + $0x8] sm:$0xff] %vm179, %v645
    $region89: #{tpu_custom_call.1} parent=1 // pred_fallthru
      _
    // Predicated region
    $region90: #{tpu_custom_call.1} parent=1 // pred_check
      _
    $region91: #{tpu_custom_call.1} parent=1 // pred_check_branch
      %654 = sbr.rel (0) target = $region93
    $region92: #{tpu_custom_call.1} parent=1 // pred_region
      %656 = vsyncadd [#allocation5], 0
      %s657 = sshll.u32 [#allocation18], 4
      %s658 = int_to_ptr.vmem [resolvable:$true] %s657
      %s659 = sshll.u32 %s11, 4
      %s660 = int_to_ptr.hbm [resolvable:$true] %s659
      %665 = dma.vmem_to_hbm [thread:$0]  %s658, 256, %s660, [#allocation5], 128, 128, 8
    $region93: #{tpu_custom_call.1} parent=1 // pred_fallthru
      _
    // Predicated region
    $region94: #{tpu_custom_call.1} parent=1 // pred_check
      _
    $region95: #{tpu_custom_call.1} parent=1 // pred_check_branch
      %667 = sbr.rel (0) target = $region97
    $region96: #{tpu_custom_call.1} parent=1 // pred_region
      %669 = dma.done [#allocation5], 256
    $region97: #{tpu_custom_call.1} parent=1 // pred_fallthru
      _
    %670 = vsyncpa [#allocation4], 1
    %671 = vsyncpa [#allocation7], 1
    %672 = vsyncpa [#allocation10], 1
    %673 = vsyncpa [#allocation13], 1
    %674 = vsyncpa [#allocation16], 1
    %675 = vsyncpa [#allocation5], 1

</llo_original>
